<compile_context>
chip_gen: v7x
topology: tpu7x:2x2x1
jax: 0.10.0
libtpu: 0.0.40
codegen_flags: <defaults>
</compile_context>

<pallas_src>
import functools
from typing import NamedTuple

import jax
import jax.numpy as jnp
import numpy as np
from jax.experimental import pallas as pl
from jax.experimental.pallas import tpu as pltpu

BN_EPS = 1e-5
LEAKY_SLOPE = 0.01  # PyTorch nn.LeakyReLU default
LANE_PAD = 128      # pad all feature dims to full lane width (lane-dense vst)


class PackedParams(NamedTuple):
    w: jax.Array       # (L, P, P) bfloat16, zero-padded, (in, out) layout
    gamma: jax.Array   # (L, 1, P) float32, 0 in padding
    beta: jax.Array    # (L, 1, P) float32, 0 in padding
    out_dim: int       # logical output width


def _decoder_kernel(num_layers, x_ref, w_ref, g_ref, b_ref, out_ref):
    """All layers fused, whole batch resident in VMEM (single grid point).

    x_ref  : (B, P) f32     padded input activations
    w_ref  : (L, P, P) bf16 stacked, zero-padded weights (in, out)
    g_ref  : (L, 1, P) f32  gamma (0 in padding -> padded lanes forced to 0)
    b_ref  : (L, 1, P) f32  beta  (0 in padding)
    out_ref: (B, P) f32     padded output
    """
    h = x_ref[...]
    inv_b = jnp.float32(1.0 / x_ref.shape[0])  # static batch size

    for i in range(num_layers):
        w = w_ref[i]        # (P, P) bf16, static slice
        gamma = g_ref[i]    # (1, P)
        beta = b_ref[i]     # (1, P)

        # Linear (MXU, bf16 inputs, f32 accumulate).  No bias: it cancels
        # exactly under training-mode BatchNorm.
        z = jnp.dot(h.astype(jnp.bfloat16), w, preferred_element_type=jnp.float32)

        # BatchNorm1d, training-mode stats; var = E[z^2] - mean^2 so the two
        # reductions have no serial dependency.  Clamp against f32 cancellation.
        s1 = jnp.sum(z, axis=0, keepdims=True)
        s2 = jnp.sum(z * z, axis=0, keepdims=True)
        mean = s1 * inv_b
        var = jnp.maximum(s2 * inv_b - mean * mean, 0.0)

        # Fold BN affine into one scale/shift (2 VPU ops over (B, P)).
        scale = gamma * jax.lax.rsqrt(var + BN_EPS)   # (1, P), rsqrt on EUP
        shift = beta - mean * scale                    # (1, P)
        y = z * scale + shift

        # Activation
        if i < num_layers - 1:
            h = jnp.where(y > 0, y, LEAKY_SLOPE * y)   # LeakyReLU
        else:
            h = jnp.tanh(y)                            # final Tanh

    out_ref[...] = h.astype(out_ref.dtype)


def pack_params(params, lane_pad=LANE_PAD):
    """One-time packing: per-layer (W, b, gamma, beta) -> 3 lane-dense arrays.

    Runs in numpy off the forward path.  The Linear bias is accepted for
    interface compatibility but intentionally not packed (no-op under
    training-mode BatchNorm).
    """
    L = len(params)
    P = lane_pad
    out_dim = int(params[-1][0].shape[1])

    w_stack = np.zeros((L, P, P), np.float32)
    gamma_stack = np.zeros((L, 1, P), np.float32)
    beta_stack = np.zeros((L, 1, P), np.float32)
    for i, (w, _b, g, be) in enumerate(params):
        din, dout = w.shape
        w_stack[i, :din, :dout] = np.asarray(w, np.float32)
        gamma_stack[i, 0, :dout] = np.asarray(g, np.float32)
        beta_stack[i, 0, :dout] = np.asarray(be, np.float32)

    return PackedParams(
        w=jnp.asarray(w_stack).astype(jnp.bfloat16),
        gamma=jnp.asarray(gamma_stack),
        beta=jnp.asarray(beta_stack),
        out_dim=out_dim,
    )


@functools.partial(jax.jit, static_argnums=(4,))
def _forward_jit(x, w_stack, gamma_stack, beta_stack, out_dim):
    B, d_in = x.shape
    L, P, _ = w_stack.shape

    # Only per-call host work: pad the input to the lane width.
    x_p = jnp.zeros((B, P), jnp.float32).at[:, :d_in].set(x.astype(jnp.float32))

    kernel = functools.partial(_decoder_kernel, L)

    flops = 2 * B * L * P * P                      # padded matmuls
    transcendentals = B * P + L * P                # tanh + per-layer rsqrt
    bytes_accessed = (4 * B * P                    # x
                      + 2 * L * P * P              # bf16 weights
                      + 2 * 4 * L * P              # gamma + beta
                      + 4 * B * P)                 # out

    # Resident set (with sublane padding of the (1,P) rows) plus ~6 f32
    # intermediates of (B,P); 4x headroom, >= 8 MiB.  Tiny vs VMEM on all gens.
    resident = (4 * B * P + 2 * L * P * P + 2 * 4 * L * 8 * P + 4 * B * P
                + 6 * 4 * B * P)
    vmem_limit = max(4 * resident, 8 << 20)

    out_padded = pl.pallas_call(
        kernel,
        out_shape=jax.ShapeDtypeStruct((B, P), jnp.float32),
        in_specs=[pl.BlockSpec(memory_space=pltpu.MemorySpace.VMEM)] * 4,
        out_specs=pl.BlockSpec(memory_space=pltpu.MemorySpace.VMEM),
        compiler_params=pltpu.CompilerParams(vmem_limit_bytes=vmem_limit),
        cost_estimate=pl.CostEstimate(
            flops=flops,
            transcendentals=transcendentals,
            bytes_accessed=bytes_accessed,
        ),
    )(x_p, w_stack, gamma_stack, beta_stack)

    return out_padded[:, :out_dim]


def vec_decoder_forward(x, packed: PackedParams):
    """x: (B, latent_dim) f32, packed: output of pack_params()."""
    return _forward_jit(x, packed.w, packed.gamma, packed.beta, packed.out_dim)


def build_params(key, latent_dim, x_dim):
    """Deterministic synthetic parameters matching VecDecoder's layer shapes."""
    dims = np.linspace(latent_dim, x_dim, 4, dtype="int64").tolist()
    layer_dims = []
    d_in = latent_dim
    for d in dims:
        layer_dims.append((int(d_in), int(d)))
        d_in = d
    layer_dims.append((int(d_in), int(x_dim)))  # final Linear + BN + Tanh

    params = []
    for (din, dout) in layer_dims:
        key, kw, kb, kg, kbe = jax.random.split(key, 5)
        w = jax.random.normal(kw, (din, dout), jnp.float32) * (1.0 / np.sqrt(din))
        b = jax.random.normal(kb, (dout,), jnp.float32) * 0.05
        gamma = 1.0 + 0.1 * jax.random.normal(kg, (dout,), jnp.float32)
        beta = 0.05 * jax.random.normal(kbe, (dout,), jnp.float32)
        params.append((w, b, gamma, beta))
    return params


def reference_forward(x, params, quantize_weights=False):
    """Pure-JAX reference with the PyTorch semantics (incl. bias).

    quantize_weights=True mirrors the kernel's deliberate bf16 weight storage
    (bf16 inputs to the matmul, f32 accumulation) for a tight comparison.
    """
    h = x.astype(jnp.float32)
    n = len(params)
    for i, (w, b, gamma, beta) in enumerate(params):
        if quantize_weights:
            z = jnp.dot(h.astype(jnp.bfloat16), w.astype(jnp.bfloat16),
                        preferred_element_type=jnp.float32) + b[None, :]
        else:
            z = h @ w + b[None, :]
        mean = jnp.mean(z, axis=0, keepdims=True)
        var = jnp.mean((z - mean) ** 2, axis=0, keepdims=True)
        y = gamma[None, :] * (z - mean) * jax.lax.rsqrt(var + BN_EPS) + beta[None, :]
        h = jnp.where(y > 0, y, LEAKY_SLOPE * y) if i < n - 1 else jnp.tanh(y)
    return h


if __name__ == "__main__":
    batch, latent_dim, x_dim = 8, 8, 32

    key = jax.random.PRNGKey(0)
    key, kx = jax.random.split(key)
    x = jax.random.normal(kx, (batch, latent_dim), jnp.float32)
    params = build_params(key, latent_dim, x_dim)

    # One-time packing (off the per-call forward path).
    packed = pack_params(params)

    out = vec_decoder_forward(x, packed)
    out = jax.block_until_ready(out)
    assert out.shape == (batch, x_dim), out.shape

    # Tight check vs a reference using the same bf16-quantized weights.
    ref_q = reference_forward(x, params, quantize_weights=True)
    np.testing.assert_allclose(np.asarray(out), np.asarray(ref_q),
                               rtol=5e-3, atol=5e-3)

    # Sanity check vs the exact f32 module semantics (bf16 weight storage is a
    # deliberate approximation, hence the looser tolerance).
    ref_f32 = reference_forward(x, params, quantize_weights=False)
    np.testing.assert_allclose(np.asarray(out), np.asarray(ref_f32),
                               rtol=0.0, atol=7.5e-2)

    print("KERNEL_OK")
</pallas_src>

<mosaic_0001>
module attributes {stable_mosaic.version = 11 : i64} {
  func.func @_decoder_kernel(%arg0: memref<8x128xf32, #tpu.memory_space<vmem>>, %arg1: memref<5x128x128xbf16, #tpu.memory_space<vmem>>, %arg2: memref<5x1x128xf32, #tpu.memory_space<vmem>>, %arg3: memref<5x1x128xf32, #tpu.memory_space<vmem>>, %arg4: memref<8x128xf32, #tpu.memory_space<vmem>>) attributes {dimension_semantics = [], scalar_prefetch = 0 : i64, scratch_operands = 0 : i64, tpu.core_type = #tpu.core_type<tc>} {
    %c0 = arith.constant 0 : index
    %c0_0 = arith.constant 0 : index
    %0 = vector.load %arg0[%c0, %c0_0] : memref<8x128xf32, #tpu.memory_space<vmem>>, vector<8x128xf32>
    %c0_1 = arith.constant 0 : index
    %c0_2 = arith.constant 0 : index
    %c0_3 = arith.constant 0 : index
    %1 = vector.load %arg1[%c0_1, %c0_2, %c0_3] : memref<5x128x128xbf16, #tpu.memory_space<vmem>>, vector<1x128x128xbf16>
    %2 = vector.shape_cast %1 : vector<1x128x128xbf16> to vector<128x128xbf16>
    %c0_4 = arith.constant 0 : index
    %c0_5 = arith.constant 0 : index
    %c0_6 = arith.constant 0 : index
    %3 = vector.load %arg2[%c0_4, %c0_5, %c0_6] : memref<5x1x128xf32, #tpu.memory_space<vmem>>, vector<1x1x128xf32>
    %4 = vector.shape_cast %3 : vector<1x1x128xf32> to vector<1x128xf32>
    %c0_7 = arith.constant 0 : index
    %c0_8 = arith.constant 0 : index
    %c0_9 = arith.constant 0 : index
    %5 = vector.load %arg3[%c0_7, %c0_8, %c0_9] : memref<5x1x128xf32, #tpu.memory_space<vmem>>, vector<1x1x128xf32>
    %6 = vector.shape_cast %5 : vector<1x1x128xf32> to vector<1x128xf32>
    %7 = arith.truncf %0 : vector<8x128xf32> to vector<8x128xbf16>
    %cst = arith.constant dense<0.000000e+00> : vector<8x128xf32>
    %8 = tpu.matmul %7, %2, %cst {dimension_numbers = #tpu.dot_dimension_numbers<[1], [0], [0], [1], [0, 0, 1, 1], [], []>} : vector<8x128xbf16>, vector<128x128xbf16>, vector<8x128xf32> -> vector<8x128xf32>
    %cst_10 = arith.constant dense<0.000000e+00> : vector<128xf32>
    %9 = vector.multi_reduction <add>, %8, %cst_10 [0] : vector<8x128xf32> to vector<128xf32>
    %10 = vector.shape_cast %9 : vector<128xf32> to vector<1x128xf32>
    %11 = arith.mulf %8, %8 : vector<8x128xf32>
    %cst_11 = arith.constant dense<0.000000e+00> : vector<128xf32>
    %12 = vector.multi_reduction <add>, %11, %cst_11 [0] : vector<8x128xf32> to vector<128xf32>
    %13 = vector.shape_cast %12 : vector<128xf32> to vector<1x128xf32>
    %cst_12 = arith.constant 1.250000e-01 : f32
    %14 = vector.broadcast %cst_12 : f32 to vector<1x128xf32>
    %15 = arith.mulf %10, %14 : vector<1x128xf32>
    %cst_13 = arith.constant 1.250000e-01 : f32
    %16 = vector.broadcast %cst_13 : f32 to vector<1x128xf32>
    %17 = arith.mulf %13, %16 : vector<1x128xf32>
    %18 = arith.mulf %15, %15 : vector<1x128xf32>
    %19 = arith.subf %17, %18 : vector<1x128xf32>
    %cst_14 = arith.constant 0.000000e+00 : f32
    %20 = vector.broadcast %cst_14 : f32 to vector<1x128xf32>
    %21 = arith.maximumf %19, %20 : vector<1x128xf32>
    %cst_15 = arith.constant 9.99999974E-6 : f32
    %22 = vector.broadcast %cst_15 : f32 to vector<1x128xf32>
    %23 = arith.addf %21, %22 : vector<1x128xf32>
    %24 = math.rsqrt %23 : vector<1x128xf32>
    %25 = arith.mulf %4, %24 : vector<1x128xf32>
    %26 = arith.mulf %15, %25 : vector<1x128xf32>
    %27 = arith.subf %6, %26 : vector<1x128xf32>
    %28 = vector.broadcast %25 : vector<1x128xf32> to vector<8x128xf32>
    %29 = arith.mulf %8, %28 : vector<8x128xf32>
    %30 = vector.broadcast %27 : vector<1x128xf32> to vector<8x128xf32>
    %31 = arith.addf %29, %30 : vector<8x128xf32>
    %cst_16 = arith.constant 0.000000e+00 : f32
    %32 = vector.broadcast %cst_16 : f32 to vector<8x128xf32>
    %33 = arith.cmpf ogt, %31, %32 : vector<8x128xf32>
    %cst_17 = arith.constant 0.00999999977 : f32
    %34 = vector.broadcast %cst_17 : f32 to vector<8x128xf32>
    %35 = arith.mulf %34, %31 : vector<8x128xf32>
    %36 = arith.select %33, %31, %35 : vector<8x128xi1>, vector<8x128xf32>
    %c1 = arith.constant 1 : index
    %c0_18 = arith.constant 0 : index
    %c0_19 = arith.constant 0 : index
    %37 = vector.load %arg1[%c1, %c0_18, %c0_19] : memref<5x128x128xbf16, #tpu.memory_space<vmem>>, vector<1x128x128xbf16>
    %38 = vector.shape_cast %37 : vector<1x128x128xbf16> to vector<128x128xbf16>
    %c1_20 = arith.constant 1 : index
    %c0_21 = arith.constant 0 : index
    %c0_22 = arith.constant 0 : index
    %39 = vector.load %arg2[%c1_20, %c0_21, %c0_22] : memref<5x1x128xf32, #tpu.memory_space<vmem>>, vector<1x1x128xf32>
    %40 = vector.shape_cast %39 : vector<1x1x128xf32> to vector<1x128xf32>
    %c1_23 = arith.constant 1 : index
    %c0_24 = arith.constant 0 : index
    %c0_25 = arith.constant 0 : index
    %41 = vector.load %arg3[%c1_23, %c0_24, %c0_25] : memref<5x1x128xf32, #tpu.memory_space<vmem>>, vector<1x1x128xf32>
    %42 = vector.shape_cast %41 : vector<1x1x128xf32> to vector<1x128xf32>
    %43 = arith.truncf %36 : vector<8x128xf32> to vector<8x128xbf16>
    %cst_26 = arith.constant dense<0.000000e+00> : vector<8x128xf32>
    %44 = tpu.matmul %43, %38, %cst_26 {dimension_numbers = #tpu.dot_dimension_numbers<[1], [0], [0], [1], [0, 0, 1, 1], [], []>} : vector<8x128xbf16>, vector<128x128xbf16>, vector<8x128xf32> -> vector<8x128xf32>
    %cst_27 = arith.constant dense<0.000000e+00> : vector<128xf32>
    %45 = vector.multi_reduction <add>, %44, %cst_27 [0] : vector<8x128xf32> to vector<128xf32>
    %46 = vector.shape_cast %45 : vector<128xf32> to vector<1x128xf32>
    %47 = arith.mulf %44, %44 : vector<8x128xf32>
    %cst_28 = arith.constant dense<0.000000e+00> : vector<128xf32>
    %48 = vector.multi_reduction <add>, %47, %cst_28 [0] : vector<8x128xf32> to vector<128xf32>
    %49 = vector.shape_cast %48 : vector<128xf32> to vector<1x128xf32>
    %cst_29 = arith.constant 1.250000e-01 : f32
    %50 = vector.broadcast %cst_29 : f32 to vector<1x128xf32>
    %51 = arith.mulf %46, %50 : vector<1x128xf32>
    %cst_30 = arith.constant 1.250000e-01 : f32
    %52 = vector.broadcast %cst_30 : f32 to vector<1x128xf32>
    %53 = arith.mulf %49, %52 : vector<1x128xf32>
    %54 = arith.mulf %51, %51 : vector<1x128xf32>
    %55 = arith.subf %53, %54 : vector<1x128xf32>
    %cst_31 = arith.constant 0.000000e+00 : f32
    %56 = vector.broadcast %cst_31 : f32 to vector<1x128xf32>
    %57 = arith.maximumf %55, %56 : vector<1x128xf32>
    %cst_32 = arith.constant 9.99999974E-6 : f32
    %58 = vector.broadcast %cst_32 : f32 to vector<1x128xf32>
    %59 = arith.addf %57, %58 : vector<1x128xf32>
    %60 = math.rsqrt %59 : vector<1x128xf32>
    %61 = arith.mulf %40, %60 : vector<1x128xf32>
    %62 = arith.mulf %51, %61 : vector<1x128xf32>
    %63 = arith.subf %42, %62 : vector<1x128xf32>
    %64 = vector.broadcast %61 : vector<1x128xf32> to vector<8x128xf32>
    %65 = arith.mulf %44, %64 : vector<8x128xf32>
    %66 = vector.broadcast %63 : vector<1x128xf32> to vector<8x128xf32>
    %67 = arith.addf %65, %66 : vector<8x128xf32>
    %cst_33 = arith.constant 0.000000e+00 : f32
    %68 = vector.broadcast %cst_33 : f32 to vector<8x128xf32>
    %69 = arith.cmpf ogt, %67, %68 : vector<8x128xf32>
    %cst_34 = arith.constant 0.00999999977 : f32
    %70 = vector.broadcast %cst_34 : f32 to vector<8x128xf32>
    %71 = arith.mulf %70, %67 : vector<8x128xf32>
    %72 = arith.select %69, %67, %71 : vector<8x128xi1>, vector<8x128xf32>
    %c2 = arith.constant 2 : index
    %c0_35 = arith.constant 0 : index
    %c0_36 = arith.constant 0 : index
    %73 = vector.load %arg1[%c2, %c0_35, %c0_36] : memref<5x128x128xbf16, #tpu.memory_space<vmem>>, vector<1x128x128xbf16>
    %74 = vector.shape_cast %73 : vector<1x128x128xbf16> to vector<128x128xbf16>
    %c2_37 = arith.constant 2 : index
    %c0_38 = arith.constant 0 : index
    %c0_39 = arith.constant 0 : index
    %75 = vector.load %arg2[%c2_37, %c0_38, %c0_39] : memref<5x1x128xf32, #tpu.memory_space<vmem>>, vector<1x1x128xf32>
    %76 = vector.shape_cast %75 : vector<1x1x128xf32> to vector<1x128xf32>
    %c2_40 = arith.constant 2 : index
    %c0_41 = arith.constant 0 : index
    %c0_42 = arith.constant 0 : index
    %77 = vector.load %arg3[%c2_40, %c0_41, %c0_42] : memref<5x1x128xf32, #tpu.memory_space<vmem>>, vector<1x1x128xf32>
    %78 = vector.shape_cast %77 : vector<1x1x128xf32> to vector<1x128xf32>
    %79 = arith.truncf %72 : vector<8x128xf32> to vector<8x128xbf16>
    %cst_43 = arith.constant dense<0.000000e+00> : vector<8x128xf32>
    %80 = tpu.matmul %79, %74, %cst_43 {dimension_numbers = #tpu.dot_dimension_numbers<[1], [0], [0], [1], [0, 0, 1, 1], [], []>} : vector<8x128xbf16>, vector<128x128xbf16>, vector<8x128xf32> -> vector<8x128xf32>
    %cst_44 = arith.constant dense<0.000000e+00> : vector<128xf32>
    %81 = vector.multi_reduction <add>, %80, %cst_44 [0] : vector<8x128xf32> to vector<128xf32>
    %82 = vector.shape_cast %81 : vector<128xf32> to vector<1x128xf32>
    %83 = arith.mulf %80, %80 : vector<8x128xf32>
    %cst_45 = arith.constant dense<0.000000e+00> : vector<128xf32>
    %84 = vector.multi_reduction <add>, %83, %cst_45 [0] : vector<8x128xf32> to vector<128xf32>
    %85 = vector.shape_cast %84 : vector<128xf32> to vector<1x128xf32>
    %cst_46 = arith.constant 1.250000e-01 : f32
    %86 = vector.broadcast %cst_46 : f32 to vector<1x128xf32>
    %87 = arith.mulf %82, %86 : vector<1x128xf32>
    %cst_47 = arith.constant 1.250000e-01 : f32
    %88 = vector.broadcast %cst_47 : f32 to vector<1x128xf32>
    %89 = arith.mulf %85, %88 : vector<1x128xf32>
    %90 = arith.mulf %87, %87 : vector<1x128xf32>
    %91 = arith.subf %89, %90 : vector<1x128xf32>
    %cst_48 = arith.constant 0.000000e+00 : f32
    %92 = vector.broadcast %cst_48 : f32 to vector<1x128xf32>
    %93 = arith.maximumf %91, %92 : vector<1x128xf32>
    %cst_49 = arith.constant 9.99999974E-6 : f32
    %94 = vector.broadcast %cst_49 : f32 to vector<1x128xf32>
    %95 = arith.addf %93, %94 : vector<1x128xf32>
    %96 = math.rsqrt %95 : vector<1x128xf32>
    %97 = arith.mulf %76, %96 : vector<1x128xf32>
    %98 = arith.mulf %87, %97 : vector<1x128xf32>
    %99 = arith.subf %78, %98 : vector<1x128xf32>
    %100 = vector.broadcast %97 : vector<1x128xf32> to vector<8x128xf32>
    %101 = arith.mulf %80, %100 : vector<8x128xf32>
    %102 = vector.broadcast %99 : vector<1x128xf32> to vector<8x128xf32>
    %103 = arith.addf %101, %102 : vector<8x128xf32>
    %cst_50 = arith.constant 0.000000e+00 : f32
    %104 = vector.broadcast %cst_50 : f32 to vector<8x128xf32>
    %105 = arith.cmpf ogt, %103, %104 : vector<8x128xf32>
    %cst_51 = arith.constant 0.00999999977 : f32
    %106 = vector.broadcast %cst_51 : f32 to vector<8x128xf32>
    %107 = arith.mulf %106, %103 : vector<8x128xf32>
    %108 = arith.select %105, %103, %107 : vector<8x128xi1>, vector<8x128xf32>
    %c3 = arith.constant 3 : index
    %c0_52 = arith.constant 0 : index
    %c0_53 = arith.constant 0 : index
    %109 = vector.load %arg1[%c3, %c0_52, %c0_53] : memref<5x128x128xbf16, #tpu.memory_space<vmem>>, vector<1x128x128xbf16>
    %110 = vector.shape_cast %109 : vector<1x128x128xbf16> to vector<128x128xbf16>
    %c3_54 = arith.constant 3 : index
    %c0_55 = arith.constant 0 : index
    %c0_56 = arith.constant 0 : index
    %111 = vector.load %arg2[%c3_54, %c0_55, %c0_56] : memref<5x1x128xf32, #tpu.memory_space<vmem>>, vector<1x1x128xf32>
    %112 = vector.shape_cast %111 : vector<1x1x128xf32> to vector<1x128xf32>
    %c3_57 = arith.constant 3 : index
    %c0_58 = arith.constant 0 : index
    %c0_59 = arith.constant 0 : index
    %113 = vector.load %arg3[%c3_57, %c0_58, %c0_59] : memref<5x1x128xf32, #tpu.memory_space<vmem>>, vector<1x1x128xf32>
    %114 = vector.shape_cast %113 : vector<1x1x128xf32> to vector<1x128xf32>
    %115 = arith.truncf %108 : vector<8x128xf32> to vector<8x128xbf16>
    %cst_60 = arith.constant dense<0.000000e+00> : vector<8x128xf32>
    %116 = tpu.matmul %115, %110, %cst_60 {dimension_numbers = #tpu.dot_dimension_numbers<[1], [0], [0], [1], [0, 0, 1, 1], [], []>} : vector<8x128xbf16>, vector<128x128xbf16>, vector<8x128xf32> -> vector<8x128xf32>
    %cst_61 = arith.constant dense<0.000000e+00> : vector<128xf32>
    %117 = vector.multi_reduction <add>, %116, %cst_61 [0] : vector<8x128xf32> to vector<128xf32>
    %118 = vector.shape_cast %117 : vector<128xf32> to vector<1x128xf32>
    %119 = arith.mulf %116, %116 : vector<8x128xf32>
    %cst_62 = arith.constant dense<0.000000e+00> : vector<128xf32>
    %120 = vector.multi_reduction <add>, %119, %cst_62 [0] : vector<8x128xf32> to vector<128xf32>
    %121 = vector.shape_cast %120 : vector<128xf32> to vector<1x128xf32>
    %cst_63 = arith.constant 1.250000e-01 : f32
    %122 = vector.broadcast %cst_63 : f32 to vector<1x128xf32>
    %123 = arith.mulf %118, %122 : vector<1x128xf32>
    %cst_64 = arith.constant 1.250000e-01 : f32
    %124 = vector.broadcast %cst_64 : f32 to vector<1x128xf32>
    %125 = arith.mulf %121, %124 : vector<1x128xf32>
    %126 = arith.mulf %123, %123 : vector<1x128xf32>
    %127 = arith.subf %125, %126 : vector<1x128xf32>
    %cst_65 = arith.constant 0.000000e+00 : f32
    %128 = vector.broadcast %cst_65 : f32 to vector<1x128xf32>
    %129 = arith.maximumf %127, %128 : vector<1x128xf32>
    %cst_66 = arith.constant 9.99999974E-6 : f32
    %130 = vector.broadcast %cst_66 : f32 to vector<1x128xf32>
    %131 = arith.addf %129, %130 : vector<1x128xf32>
    %132 = math.rsqrt %131 : vector<1x128xf32>
    %133 = arith.mulf %112, %132 : vector<1x128xf32>
    %134 = arith.mulf %123, %133 : vector<1x128xf32>
    %135 = arith.subf %114, %134 : vector<1x128xf32>
    %136 = vector.broadcast %133 : vector<1x128xf32> to vector<8x128xf32>
    %137 = arith.mulf %116, %136 : vector<8x128xf32>
    %138 = vector.broadcast %135 : vector<1x128xf32> to vector<8x128xf32>
    %139 = arith.addf %137, %138 : vector<8x128xf32>
    %cst_67 = arith.constant 0.000000e+00 : f32
    %140 = vector.broadcast %cst_67 : f32 to vector<8x128xf32>
    %141 = arith.cmpf ogt, %139, %140 : vector<8x128xf32>
    %cst_68 = arith.constant 0.00999999977 : f32
    %142 = vector.broadcast %cst_68 : f32 to vector<8x128xf32>
    %143 = arith.mulf %142, %139 : vector<8x128xf32>
    %144 = arith.select %141, %139, %143 : vector<8x128xi1>, vector<8x128xf32>
    %c4 = arith.constant 4 : index
    %c0_69 = arith.constant 0 : index
    %c0_70 = arith.constant 0 : index
    %145 = vector.load %arg1[%c4, %c0_69, %c0_70] : memref<5x128x128xbf16, #tpu.memory_space<vmem>>, vector<1x128x128xbf16>
    %146 = vector.shape_cast %145 : vector<1x128x128xbf16> to vector<128x128xbf16>
    %c4_71 = arith.constant 4 : index
    %c0_72 = arith.constant 0 : index
    %c0_73 = arith.constant 0 : index
    %147 = vector.load %arg2[%c4_71, %c0_72, %c0_73] : memref<5x1x128xf32, #tpu.memory_space<vmem>>, vector<1x1x128xf32>
    %148 = vector.shape_cast %147 : vector<1x1x128xf32> to vector<1x128xf32>
    %c4_74 = arith.constant 4 : index
    %c0_75 = arith.constant 0 : index
    %c0_76 = arith.constant 0 : index
    %149 = vector.load %arg3[%c4_74, %c0_75, %c0_76] : memref<5x1x128xf32, #tpu.memory_space<vmem>>, vector<1x1x128xf32>
    %150 = vector.shape_cast %149 : vector<1x1x128xf32> to vector<1x128xf32>
    %151 = arith.truncf %144 : vector<8x128xf32> to vector<8x128xbf16>
    %cst_77 = arith.constant dense<0.000000e+00> : vector<8x128xf32>
    %152 = tpu.matmul %151, %146, %cst_77 {dimension_numbers = #tpu.dot_dimension_numbers<[1], [0], [0], [1], [0, 0, 1, 1], [], []>} : vector<8x128xbf16>, vector<128x128xbf16>, vector<8x128xf32> -> vector<8x128xf32>
    %cst_78 = arith.constant dense<0.000000e+00> : vector<128xf32>
    %153 = vector.multi_reduction <add>, %152, %cst_78 [0] : vector<8x128xf32> to vector<128xf32>
    %154 = vector.shape_cast %153 : vector<128xf32> to vector<1x128xf32>
    %155 = arith.mulf %152, %152 : vector<8x128xf32>
    %cst_79 = arith.constant dense<0.000000e+00> : vector<128xf32>
    %156 = vector.multi_reduction <add>, %155, %cst_79 [0] : vector<8x128xf32> to vector<128xf32>
    %157 = vector.shape_cast %156 : vector<128xf32> to vector<1x128xf32>
    %cst_80 = arith.constant 1.250000e-01 : f32
    %158 = vector.broadcast %cst_80 : f32 to vector<1x128xf32>
    %159 = arith.mulf %154, %158 : vector<1x128xf32>
    %cst_81 = arith.constant 1.250000e-01 : f32
    %160 = vector.broadcast %cst_81 : f32 to vector<1x128xf32>
    %161 = arith.mulf %157, %160 : vector<1x128xf32>
    %162 = arith.mulf %159, %159 : vector<1x128xf32>
    %163 = arith.subf %161, %162 : vector<1x128xf32>
    %cst_82 = arith.constant 0.000000e+00 : f32
    %164 = vector.broadcast %cst_82 : f32 to vector<1x128xf32>
    %165 = arith.maximumf %163, %164 : vector<1x128xf32>
    %cst_83 = arith.constant 9.99999974E-6 : f32
    %166 = vector.broadcast %cst_83 : f32 to vector<1x128xf32>
    %167 = arith.addf %165, %166 : vector<1x128xf32>
    %168 = math.rsqrt %167 : vector<1x128xf32>
    %169 = arith.mulf %148, %168 : vector<1x128xf32>
    %170 = arith.mulf %159, %169 : vector<1x128xf32>
    %171 = arith.subf %150, %170 : vector<1x128xf32>
    %172 = vector.broadcast %169 : vector<1x128xf32> to vector<8x128xf32>
    %173 = arith.mulf %152, %172 : vector<8x128xf32>
    %174 = vector.broadcast %171 : vector<1x128xf32> to vector<8x128xf32>
    %175 = arith.addf %173, %174 : vector<8x128xf32>
    %176 = math.tanh %175 : vector<8x128xf32>
    %c0_84 = arith.constant 0 : index
    %c0_85 = arith.constant 0 : index
    %177 = vector.load %arg4[%c0_84, %c0_85] : memref<8x128xf32, #tpu.memory_space<vmem>>, vector<8x128xf32>
    tpu.vector_store %arg4[%c0_84, %c0_85], %176 {strides = array<i32>} : memref<8x128xf32, #tpu.memory_space<vmem>>, vector<8x128xf32>,
    return
  }
}

</mosaic_0001>

<llo_original>
// kernel: _forward_jit.1
$region0: #{_forward_jit.1}
  #allocation0 [shape = 'u32[]', space=smem, size = 0x4, offset = 0x4, fixed_abs, tag = 'smem constant byte address 0x4 - core index']
  #allocation1 [shape = 'u32[144,128]{1,0:T(1,128)}', space=vmem, size = 0x12000, scoped, tag = 'internal scratch']
  %s0 = inlined_call_operand.vmem [shape: f32[8,128], index: 0, kind: input, shape index: {}]
  %s1 = inlined_call_operand.hbm [shape: bf16[5,128,128], index: 1, kind: input, shape index: {}]
  %s2 = inlined_call_operand.vmem [shape: f32[5,1,128], index: 2, kind: input, shape index: {}]
  %s3 = inlined_call_operand.vmem [shape: f32[5,1,128], index: 3, kind: input, shape index: {}]
  %s4 = inlined_call_operand.hbm [shape: f32[8,128], index: 4, kind: output, shape index: {}]
  %s5 = sld [smem:[#allocation0]]
  $region30: #{_forward_jit.1} parent=0
    _
  %s7 = ssub.s32 1, %s5
  %s8 = scalar_select 0, %s7, %s5
  $region1: #{_forward_jit.1} parent=0
    #allocation2 [shape = 'u8[163840]{0}', space=vmem, size = 0x28000, scoped, tag = 'input window, operand 1, single buffered']
    #allocation3 [shape = 's32[1]{0}', space=sflag, size = 0x4, scoped, tag = 'scoped memory for _forward_jit.1']
    #allocation4 [shape = 's32[1]{0}', space=sflag, size = 0x4, scoped, tag = 'scoped memory for _forward_jit.1']
    #allocation5 [shape = 'u8[4096]{0}', space=vmem, size = 0x1000, scoped, tag = 'output window, operand 0, single buffered']
    %9 = vsyncpa [#allocation3], 0
    %10 = vsyncpa [#allocation4], 0
    // Predicated region
    $region2: #{_forward_jit.1} parent=1 // pred_check
      _
    $region3: #{_forward_jit.1} parent=1 // pred_check_branch
      %12 = sbr.rel (0) target = $region5
    $region4: #{_forward_jit.1} parent=1 // pred_region
      _
    $region5: #{_forward_jit.1} parent=1 // pred_fallthru
      _
    // Predicated region
    $region6: #{_forward_jit.1} parent=1 // pred_check
      _
    $region7: #{_forward_jit.1} parent=1 // pred_check_branch
      %14 = sbr.rel (0) target = $region9
    $region8: #{_forward_jit.1} parent=1 // pred_region
      %s16 = ssub.s32 5120, 5120
      %17 = vsyncadd [#allocation3], %s16
      %s18 = sshll.u32 [#allocation2], 4
      %s19 = int_to_ptr.vmem [resolvable:$true] %s18
      %24 = dma.hbm_to_vmem [thread:$0]  %s1, 5120, %s19, [#allocation3], 64, 64, 4
    $region9: #{_forward_jit.1} parent=1 // pred_fallthru
      _
    // Predicated region
    $region10: #{_forward_jit.1} parent=1 // pred_check
      _
    $region11: #{_forward_jit.1} parent=1 // pred_check_branch
      %26 = sbr.rel (0) target = $region13
    $region12: #{_forward_jit.1} parent=1 // pred_region
      _
    $region13: #{_forward_jit.1} parent=1 // pred_fallthru
      _
    // Predicated region
    $region14: #{_forward_jit.1} parent=1 // pred_check
      _
    $region15: #{_forward_jit.1} parent=1 // pred_check_branch
      %28 = sbr.rel (0) target = $region17
    $region16: #{_forward_jit.1} parent=1 // pred_region
      _
    $region17: #{_forward_jit.1} parent=1 // pred_fallthru
      _
    // Predicated region
    $region18: #{_forward_jit.1} parent=1 // pred_check
      _
    $region19: #{_forward_jit.1} parent=1 // pred_check_branch
      %30 = sbr.rel (0) target = $region21
    $region20: #{_forward_jit.1} parent=1 // pred_region
      %31 = dma.done [#allocation3], 5120
    $region21: #{_forward_jit.1} parent=1 // pred_fallthru
      _
    %v33 = vld [vmem:[%s0] sm:$0xff]
    %v34 = vld [vmem:[#allocation2] sm:$0xf]
    %v35 = vld [vmem:[#allocation2 + $0x4] sm:$0xf]
    %v36 = vld [vmem:[#allocation2 + $0x8] sm:$0xf]
    %v37 = vld [vmem:[#allocation2 + $0xc] sm:$0xf]
    %v38 = vld [vmem:[#allocation2 + $0x10] sm:$0xf]
    %v39 = vld [vmem:[#allocation2 + $0x14] sm:$0xf]
    %v40 = vld [vmem:[#allocation2 + $0x18] sm:$0xf]
    %v41 = vld [vmem:[#allocation2 + $0x1c] sm:$0xf]
    %v42 = vld [vmem:[#allocation2 + $0x20] sm:$0xf]
    %v43 = vld [vmem:[#allocation2 + $0x24] sm:$0xf]
    %v44 = vld [vmem:[#allocation2 + $0x28] sm:$0xf]
    %v45 = vld [vmem:[#allocation2 + $0x2c] sm:$0xf]
    %v46 = vld [vmem:[#allocation2 + $0x30] sm:$0xf]
    %v47 = vld [vmem:[#allocation2 + $0x34] sm:$0xf]
    %v48 = vld [vmem:[#allocation2 + $0x38] sm:$0xf]
    %v49 = vld [vmem:[#allocation2 + $0x3c] sm:$0xf]
    %v50 = vld [vmem:[%s2] sm:$0x1]
    %v51 = vld [vmem:[%s3] sm:$0x1]
    %v52 = vpack.c.bf16 %v33, %v33
    %v69 = vunpack.c.l.b16 %v34
    %v70 = vunpack.c.l.b16 %v35
    %v71 = vunpack.c.l.b16 %v36
    %v72 = vunpack.c.l.b16 %v37
    %v73 = vunpack.c.l.b16 %v38
    %v74 = vunpack.c.l.b16 %v39
    %v75 = vunpack.c.l.b16 %v40
    %v76 = vunpack.c.l.b16 %v41
    %v77 = vunpack.c.l.b16 %v42
    %v78 = vunpack.c.l.b16 %v43
    %v79 = vunpack.c.l.b16 %v44
    %v80 = vunpack.c.l.b16 %v45
    %v81 = vunpack.c.l.b16 %v46
    %v82 = vunpack.c.l.b16 %v47
    %v83 = vunpack.c.l.b16 %v48
    %v84 = vunpack.c.l.b16 %v49
    %v85 = vpack.c.b16 %v70, %v69
    %v86 = vpack.c.b16 %v72, %v71
    %v87 = vpack.c.b16 %v74, %v73
    %v88 = vpack.c.b16 %v76, %v75
    %v89 = vpack.c.b16 %v78, %v77
    %v90 = vpack.c.b16 %v80, %v79
    %v91 = vpack.c.b16 %v82, %v81
    %v92 = vpack.c.b16 %v84, %v83
    %101 = vmatprep.subr.bf16.mxu0 0
    %102 = vmatpush1.bf16.msra.mxu0 %v85
    %103 = vmatprep.subr.bf16.mxu0 0
    %104 = vmatpush1.bf16.msra.mxu0 %v86
    %105 = vmatprep.subr.bf16.mxu0 0
    %106 = vmatpush1.bf16.msra.mxu0 %v87
    %107 = vmatprep.subr.bf16.mxu0 0
    %108 = vmatpush1.bf16.msra.mxu0 %v88
    %109 = vmatprep.subr.bf16.mxu0 0
    %110 = vmatpush1.bf16.msra.mxu0 %v89
    %111 = vmatprep.subr.bf16.mxu0 0
    %112 = vmatpush1.bf16.msra.mxu0 %v90
    %113 = vmatprep.subr.bf16.mxu0 0
    %114 = vmatpush1.bf16.msra.mxu0 %v91
    %115 = vmatprep.subr.bf16.mxu0 0
    %116 = vmatpush1.bf16.msra.mxu0 %v92
    %117 = vmatprep.subr.bf16.mxu0 0
    %118 = vmatpush1.bf16.msra.mxu0 0
    %119 = vmatprep.subr.bf16.mxu0 0
    %120 = vmatpush1.bf16.msra.mxu0 0
    %121 = vmatprep.subr.bf16.mxu0 0
    %122 = vmatpush1.bf16.msra.mxu0 0
    %123 = vmatprep.subr.bf16.mxu0 0
    %124 = vmatpush1.bf16.msra.mxu0 0
    %125 = vmatprep.subr.bf16.mxu0 0
    %126 = vmatpush1.bf16.msra.mxu0 0
    %127 = vmatprep.subr.bf16.mxu0 0
    %128 = vmatpush1.bf16.msra.mxu0 0
    %129 = vmatprep.subr.bf16.mxu0 0
    %130 = vmatpush1.bf16.msra.mxu0 0
    %131 = vmatprep.subr.bf16.mxu0 0
    %132 = vmatpush1.bf16.msra.mxu0 0
    %133 = vmatprep.mubr.bf16.mxu0 0
    %134 = vmatmul.mubr.bf16.gmra.mrb[0].mxu0 %v52
    %v135 = vpop.f32.mrb[0].mxu0
    %v136 = vadd.f32 0.0, %v135
    %v137 = vpop.f32.mrb[0].mxu0
    %v138 = vpop.f32.mrb[0].mxu0
    %v139 = vpop.f32.mrb[0].mxu0
    %140 = vdwg.mxu0
    %v141 = vrot.slane %v136, 4
    %v142 = vadd.f32 %v136, %v141
    %v143 = vrot.slane %v142, 2
    %v144 = vadd.f32 %v142, %v143
    %v145 = vrot.slane %v144, 1
    %v146 = vadd.f32 %v144, %v145
    %v147 = vmul.f32 %v136, %v136
    %v148 = vrot.slane %v147, 4
    %v149 = vadd.f32 %v147, %v148
    %v150 = vrot.slane %v149, 2
    %v151 = vadd.f32 %v149, %v150
    %v152 = vrot.slane %v151, 1
    %v153 = vadd.f32 %v151, %v152
    %v154 = vmul.f32 %v146, 0.125
    %v155 = vmul.f32 %v153, 0.125
    %v156 = vmul.f32 %v154, %v154
    %v157 = vsub.f32 %v155, %v156
    %v158 = vmax.f32 %v157, 0.0
    %v159 = vadd.f32 %v158, 1e-05
    %v160 = vrsqrt.pop %v159
    %v161 = vmul.f32 %v50, %v160
    %v162 = vmul.f32 %v154, %v161
    %v163 = vsub.f32 %v51, %v162
    %v165 = vlaneseq
    %v166 = vshrl.u32 %v165, 7
    %v167 = vsub.s32 0, %v166
    %v168 = vrot.slane %v161, %v167
    %v170 = vmul.f32 %v136, %v168
    %v172 = vlaneseq
    %v173 = vshrl.u32 %v172, 7
    %v174 = vsub.s32 0, %v173
    %v175 = vrot.slane %v163, %v174
    %v177 = vadd.f32 %v170, %v175
    %vm178 = vcmp.gt.f32.partialorder %v177, 0.0
    %v179 = vmul.f32 %v177, 0.01
    %v180 = vsel %vm178, %v177, %v179
    %s181 = scalar_lea.vmem [#allocation2], 64
    %v182 = vld [vmem:[%s181] sm:$0xf]
    %v183 = vld [vmem:[%s181 + $0x4] sm:$0xf]
    %v184 = vld [vmem:[%s181 + $0x8] sm:$0xf]
    %v185 = vld [vmem:[%s181 + $0xc] sm:$0xf]
    %v186 = vld [vmem:[%s181 + $0x10] sm:$0xf]
    %v187 = vld [vmem:[%s181 + $0x14] sm:$0xf]
    %v188 = vld [vmem:[%s181 + $0x18] sm:$0xf]
    %v189 = vld [vmem:[%s181 + $0x1c] sm:$0xf]
    %v190 = vld [vmem:[%s181 + $0x20] sm:$0xf]
    %v191 = vld [vmem:[%s181 + $0x24] sm:$0xf]
    %v192 = vld [vmem:[%s181 + $0x28] sm:$0xf]
    %v193 = vld [vmem:[%s181 + $0x2c] sm:$0xf]
    %v194 = vld [vmem:[%s181 + $0x30] sm:$0xf]
    %v195 = vld [vmem:[%s181 + $0x34] sm:$0xf]
    %v196 = vld [vmem:[%s181 + $0x38] sm:$0xf]
    %v197 = vld [vmem:[%s181 + $0x3c] sm:$0xf]
    %s198 = scalar_lea.vmem %s2, 1
    %v199 = vld [vmem:[%s198] sm:$0x1]
    %s200 = scalar_lea.vmem %s3, 1
    %v201 = vld [vmem:[%s200] sm:$0x1]
    %v202 = vpack.c.bf16 %v180, %v180
    %v219 = vunpack.c.l.b16 %v182
    %v220 = vunpack.c.l.b16 %v183
    %v221 = vunpack.c.l.b16 %v184
    %v222 = vunpack.c.l.b16 %v185
    %v223 = vunpack.c.l.b16 %v186
    %v224 = vunpack.c.l.b16 %v187
    %v225 = vunpack.c.l.b16 %v188
    %v226 = vunpack.c.l.b16 %v189
    %v227 = vunpack.c.l.b16 %v190
    %v228 = vunpack.c.l.b16 %v191
    %v229 = vunpack.c.l.b16 %v192
    %v230 = vunpack.c.l.b16 %v193
    %v231 = vunpack.c.l.b16 %v194
    %v232 = vunpack.c.l.b16 %v195
    %v233 = vunpack.c.l.b16 %v196
    %v234 = vunpack.c.l.b16 %v197
    %v235 = vpack.c.b16 %v220, %v219
    %v236 = vpack.c.b16 %v222, %v221
    %v237 = vpack.c.b16 %v224, %v223
    %v238 = vpack.c.b16 %v226, %v225
    %v239 = vpack.c.b16 %v228, %v227
    %v240 = vpack.c.b16 %v230, %v229
    %v241 = vpack.c.b16 %v232, %v231
    %v242 = vpack.c.b16 %v234, %v233
    %251 = vmatprep.subr.bf16.mxu0 0
    %252 = vmatpush1.bf16.msra.mxu0 %v235
    %253 = vmatprep.subr.bf16.mxu0 0
    %254 = vmatpush1.bf16.msra.mxu0 %v236
    %255 = vmatprep.subr.bf16.mxu0 0
    %256 = vmatpush1.bf16.msra.mxu0 %v237
    %257 = vmatprep.subr.bf16.mxu0 0
    %258 = vmatpush1.bf16.msra.mxu0 %v238
    %259 = vmatprep.subr.bf16.mxu0 0
    %260 = vmatpush1.bf16.msra.mxu0 %v239
    %261 = vmatprep.subr.bf16.mxu0 0
    %262 = vmatpush1.bf16.msra.mxu0 %v240
    %263 = vmatprep.subr.bf16.mxu0 0
    %264 = vmatpush1.bf16.msra.mxu0 %v241
    %265 = vmatprep.subr.bf16.mxu0 0
    %266 = vmatpush1.bf16.msra.mxu0 %v242
    %267 = vmatprep.subr.bf16.mxu0 0
    %268 = vmatpush1.bf16.msra.mxu0 0
    %269 = vmatprep.subr.bf16.mxu0 0
    %270 = vmatpush1.bf16.msra.mxu0 0
    %271 = vmatprep.subr.bf16.mxu0 0
    %272 = vmatpush1.bf16.msra.mxu0 0
    %273 = vmatprep.subr.bf16.mxu0 0
    %274 = vmatpush1.bf16.msra.mxu0 0
    %275 = vmatprep.subr.bf16.mxu0 0
    %276 = vmatpush1.bf16.msra.mxu0 0
    %277 = vmatprep.subr.bf16.mxu0 0
    %278 = vmatpush1.bf16.msra.mxu0 0
    %279 = vmatprep.subr.bf16.mxu0 0
    %280 = vmatpush1.bf16.msra.mxu0 0
    %281 = vmatprep.subr.bf16.mxu0 0
    %282 = vmatpush1.bf16.msra.mxu0 0
    %283 = vmatprep.mubr.bf16.mxu0 0
    %284 = vmatmul.mubr.bf16.gmra.mrb[0].mxu0 %v202
    %v285 = vpop.f32.mrb[0].mxu0
    %v286 = vadd.f32 0.0, %v285
    %v287 = vpop.f32.mrb[0].mxu0
    %v288 = vpop.f32.mrb[0].mxu0
    %v289 = vpop.f32.mrb[0].mxu0
    %290 = vdwg.mxu0
    %v291 = vrot.slane %v286, 4
    %v292 = vadd.f32 %v286, %v291
    %v293 = vrot.slane %v292, 2
    %v294 = vadd.f32 %v292, %v293
    %v295 = vrot.slane %v294, 1
    %v296 = vadd.f32 %v294, %v295
    %v297 = vmul.f32 %v286, %v286
    %v298 = vrot.slane %v297, 4
    %v299 = vadd.f32 %v297, %v298
    %v300 = vrot.slane %v299, 2
    %v301 = vadd.f32 %v299, %v300
    %v302 = vrot.slane %v301, 1
    %v303 = vadd.f32 %v301, %v302
    %v304 = vmul.f32 %v296, 0.125
    %v305 = vmul.f32 %v303, 0.125
    %v306 = vmul.f32 %v304, %v304
    %v307 = vsub.f32 %v305, %v306
    %v308 = vmax.f32 %v307, 0.0
    %v309 = vadd.f32 %v308, 1e-05
    %v310 = vrsqrt.pop %v309
    %v311 = vmul.f32 %v199, %v310
    %v312 = vmul.f32 %v304, %v311
    %v313 = vsub.f32 %v201, %v312
    %v315 = vlaneseq
    %v316 = vshrl.u32 %v315, 7
    %v317 = vsub.s32 0, %v316
    %v318 = vrot.slane %v311, %v317
    %v320 = vmul.f32 %v286, %v318
    %v322 = vlaneseq
    %v323 = vshrl.u32 %v322, 7
    %v324 = vsub.s32 0, %v323
    %v325 = vrot.slane %v313, %v324
    %v327 = vadd.f32 %v320, %v325
    %vm328 = vcmp.gt.f32.partialorder %v327, 0.0
    %v329 = vmul.f32 %v327, 0.01
    %v330 = vsel %vm328, %v327, %v329
    %s331 = scalar_lea.vmem [#allocation2], 128
    %v332 = vld [vmem:[%s331] sm:$0xf]
    %v333 = vld [vmem:[%s331 + $0x4] sm:$0xf]
    %v334 = vld [vmem:[%s331 + $0x8] sm:$0xf]
    %v335 = vld [vmem:[%s331 + $0xc] sm:$0xf]
    %v336 = vld [vmem:[%s331 + $0x10] sm:$0xf]
    %v337 = vld [vmem:[%s331 + $0x14] sm:$0xf]
    %v338 = vld [vmem:[%s331 + $0x18] sm:$0xf]
    %v339 = vld [vmem:[%s331 + $0x1c] sm:$0xf]
    %v340 = vld [vmem:[%s331 + $0x20] sm:$0xf]
    %v341 = vld [vmem:[%s331 + $0x24] sm:$0xf]
    %v342 = vld [vmem:[%s331 + $0x28] sm:$0xf]
    %v343 = vld [vmem:[%s331 + $0x2c] sm:$0xf]
    %v344 = vld [vmem:[%s331 + $0x30] sm:$0xf]
    %v345 = vld [vmem:[%s331 + $0x34] sm:$0xf]
    %v346 = vld [vmem:[%s331 + $0x38] sm:$0xf]
    %v347 = vld [vmem:[%s331 + $0x3c] sm:$0xf]
    %s348 = scalar_lea.vmem %s2, 2
    %v349 = vld [vmem:[%s348] sm:$0x1]
    %s350 = scalar_lea.vmem %s3, 2
    %v351 = vld [vmem:[%s350] sm:$0x1]
    %v352 = vpack.c.bf16 %v330, %v330
    %v369 = vunpack.c.l.b16 %v332
    %v370 = vunpack.c.l.b16 %v333
    %v371 = vunpack.c.l.b16 %v334
    %v372 = vunpack.c.l.b16 %v335
    %v373 = vunpack.c.l.b16 %v336
    %v374 = vunpack.c.l.b16 %v337
    %v375 = vunpack.c.l.b16 %v338
    %v376 = vunpack.c.l.b16 %v339
    %v377 = vunpack.c.l.b16 %v340
    %v378 = vunpack.c.l.b16 %v341
    %v379 = vunpack.c.l.b16 %v342
    %v380 = vunpack.c.l.b16 %v343
    %v381 = vunpack.c.l.b16 %v344
    %v382 = vunpack.c.l.b16 %v345
    %v383 = vunpack.c.l.b16 %v346
    %v384 = vunpack.c.l.b16 %v347
    %v385 = vpack.c.b16 %v370, %v369
    %v386 = vpack.c.b16 %v372, %v371
    %v387 = vpack.c.b16 %v374, %v373
    %v388 = vpack.c.b16 %v376, %v375
    %v389 = vpack.c.b16 %v378, %v377
    %v390 = vpack.c.b16 %v380, %v379
    %v391 = vpack.c.b16 %v382, %v381
    %v392 = vpack.c.b16 %v384, %v383
    %401 = vmatprep.subr.bf16.mxu0 0
    %402 = vmatpush1.bf16.msra.mxu0 %v385
    %403 = vmatprep.subr.bf16.mxu0 0
    %404 = vmatpush1.bf16.msra.mxu0 %v386
    %405 = vmatprep.subr.bf16.mxu0 0
    %406 = vmatpush1.bf16.msra.mxu0 %v387
    %407 = vmatprep.subr.bf16.mxu0 0
    %408 = vmatpush1.bf16.msra.mxu0 %v388
    %409 = vmatprep.subr.bf16.mxu0 0
    %410 = vmatpush1.bf16.msra.mxu0 %v389
    %411 = vmatprep.subr.bf16.mxu0 0
    %412 = vmatpush1.bf16.msra.mxu0 %v390
    %413 = vmatprep.subr.bf16.mxu0 0
    %414 = vmatpush1.bf16.msra.mxu0 %v391
    %415 = vmatprep.subr.bf16.mxu0 0
    %416 = vmatpush1.bf16.msra.mxu0 %v392
    %417 = vmatprep.subr.bf16.mxu0 0
    %418 = vmatpush1.bf16.msra.mxu0 0
    %419 = vmatprep.subr.bf16.mxu0 0
    %420 = vmatpush1.bf16.msra.mxu0 0
    %421 = vmatprep.subr.bf16.mxu0 0
    %422 = vmatpush1.bf16.msra.mxu0 0
    %423 = vmatprep.subr.bf16.mxu0 0
    %424 = vmatpush1.bf16.msra.mxu0 0
    %425 = vmatprep.subr.bf16.mxu0 0
    %426 = vmatpush1.bf16.msra.mxu0 0
    %427 = vmatprep.subr.bf16.mxu0 0
    %428 = vmatpush1.bf16.msra.mxu0 0
    %429 = vmatprep.subr.bf16.mxu0 0
    %430 = vmatpush1.bf16.msra.mxu0 0
    %431 = vmatprep.subr.bf16.mxu0 0
    %432 = vmatpush1.bf16.msra.mxu0 0
    %433 = vmatprep.mubr.bf16.mxu0 0
    %434 = vmatmul.mubr.bf16.gmra.mrb[0].mxu0 %v352
    %v435 = vpop.f32.mrb[0].mxu0
    %v436 = vadd.f32 0.0, %v435
    %v437 = vpop.f32.mrb[0].mxu0
    %v438 = vpop.f32.mrb[0].mxu0
    %v439 = vpop.f32.mrb[0].mxu0
    %440 = vdwg.mxu0
    %v441 = vrot.slane %v436, 4
    %v442 = vadd.f32 %v436, %v441
    %v443 = vrot.slane %v442, 2
    %v444 = vadd.f32 %v442, %v443
    %v445 = vrot.slane %v444, 1
    %v446 = vadd.f32 %v444, %v445
    %v447 = vmul.f32 %v436, %v436
    %v448 = vrot.slane %v447, 4
    %v449 = vadd.f32 %v447, %v448
    %v450 = vrot.slane %v449, 2
    %v451 = vadd.f32 %v449, %v450
    %v452 = vrot.slane %v451, 1
    %v453 = vadd.f32 %v451, %v452
    %v454 = vmul.f32 %v446, 0.125
    %v455 = vmul.f32 %v453, 0.125
    %v456 = vmul.f32 %v454, %v454
    %v457 = vsub.f32 %v455, %v456
    %v458 = vmax.f32 %v457, 0.0
    %v459 = vadd.f32 %v458, 1e-05
    %v460 = vrsqrt.pop %v459
    %v461 = vmul.f32 %v349, %v460
    %v462 = vmul.f32 %v454, %v461
    %v463 = vsub.f32 %v351, %v462
    %v465 = vlaneseq
    %v466 = vshrl.u32 %v465, 7
    %v467 = vsub.s32 0, %v466
    %v468 = vrot.slane %v461, %v467
    %v470 = vmul.f32 %v436, %v468
    %v472 = vlaneseq
    %v473 = vshrl.u32 %v472, 7
    %v474 = vsub.s32 0, %v473
    %v475 = vrot.slane %v463, %v474
    %v477 = vadd.f32 %v470, %v475
    %vm478 = vcmp.gt.f32.partialorder %v477, 0.0
    %v479 = vmul.f32 %v477, 0.01
    %v480 = vsel %vm478, %v477, %v479
    %s481 = scalar_lea.vmem [#allocation2], 192
    %v482 = vld [vmem:[%s481] sm:$0xf]
    %v483 = vld [vmem:[%s481 + $0x4] sm:$0xf]
    %v484 = vld [vmem:[%s481 + $0x8] sm:$0xf]
    %v485 = vld [vmem:[%s481 + $0xc] sm:$0xf]
    %v486 = vld [vmem:[%s481 + $0x10] sm:$0xf]
    %v487 = vld [vmem:[%s481 + $0x14] sm:$0xf]
    %v488 = vld [vmem:[%s481 + $0x18] sm:$0xf]
    %v489 = vld [vmem:[%s481 + $0x1c] sm:$0xf]
    %v490 = vld [vmem:[%s481 + $0x20] sm:$0xf]
    %v491 = vld [vmem:[%s481 + $0x24] sm:$0xf]
    %v492 = vld [vmem:[%s481 + $0x28] sm:$0xf]
    %v493 = vld [vmem:[%s481 + $0x2c] sm:$0xf]
    %v494 = vld [vmem:[%s481 + $0x30] sm:$0xf]
    %v495 = vld [vmem:[%s481 + $0x34] sm:$0xf]
    %v496 = vld [vmem:[%s481 + $0x38] sm:$0xf]
    %v497 = vld [vmem:[%s481 + $0x3c] sm:$0xf]
    %s498 = scalar_lea.vmem %s2, 3
    %v499 = vld [vmem:[%s498] sm:$0x1]
    %s500 = scalar_lea.vmem %s3, 3
    %v501 = vld [vmem:[%s500] sm:$0x1]
    %v502 = vpack.c.bf16 %v480, %v480
    %v519 = vunpack.c.l.b16 %v482
    %v520 = vunpack.c.l.b16 %v483
    %v521 = vunpack.c.l.b16 %v484
    %v522 = vunpack.c.l.b16 %v485
    %v523 = vunpack.c.l.b16 %v486
    %v524 = vunpack.c.l.b16 %v487
    %v525 = vunpack.c.l.b16 %v488
    %v526 = vunpack.c.l.b16 %v489
    %v527 = vunpack.c.l.b16 %v490
    %v528 = vunpack.c.l.b16 %v491
    %v529 = vunpack.c.l.b16 %v492
    %v530 = vunpack.c.l.b16 %v493
    %v531 = vunpack.c.l.b16 %v494
    %v532 = vunpack.c.l.b16 %v495
    %v533 = vunpack.c.l.b16 %v496
    %v534 = vunpack.c.l.b16 %v497
    %v535 = vpack.c.b16 %v520, %v519
    %v536 = vpack.c.b16 %v522, %v521
    %v537 = vpack.c.b16 %v524, %v523
    %v538 = vpack.c.b16 %v526, %v525
    %v539 = vpack.c.b16 %v528, %v527
    %v540 = vpack.c.b16 %v530, %v529
    %v541 = vpack.c.b16 %v532, %v531
    %v542 = vpack.c.b16 %v534, %v533
    %551 = vmatprep.subr.bf16.mxu0 0
    %552 = vmatpush1.bf16.msra.mxu0 %v535
    %553 = vmatprep.subr.bf16.mxu0 0
    %554 = vmatpush1.bf16.msra.mxu0 %v536
    %555 = vmatprep.subr.bf16.mxu0 0
    %556 = vmatpush1.bf16.msra.mxu0 %v537
    %557 = vmatprep.subr.bf16.mxu0 0
    %558 = vmatpush1.bf16.msra.mxu0 %v538
    %559 = vmatprep.subr.bf16.mxu0 0
    %560 = vmatpush1.bf16.msra.mxu0 %v539
    %561 = vmatprep.subr.bf16.mxu0 0
    %562 = vmatpush1.bf16.msra.mxu0 %v540
    %563 = vmatprep.subr.bf16.mxu0 0
    %564 = vmatpush1.bf16.msra.mxu0 %v541
    %565 = vmatprep.subr.bf16.mxu0 0
    %566 = vmatpush1.bf16.msra.mxu0 %v542
    %567 = vmatprep.subr.bf16.mxu0 0
    %568 = vmatpush1.bf16.msra.mxu0 0
    %569 = vmatprep.subr.bf16.mxu0 0
    %570 = vmatpush1.bf16.msra.mxu0 0
    %571 = vmatprep.subr.bf16.mxu0 0
    %572 = vmatpush1.bf16.msra.mxu0 0
    %573 = vmatprep.subr.bf16.mxu0 0
    %574 = vmatpush1.bf16.msra.mxu0 0
    %575 = vmatprep.subr.bf16.mxu0 0
    %576 = vmatpush1.bf16.msra.mxu0 0
    %577 = vmatprep.subr.bf16.mxu0 0
    %578 = vmatpush1.bf16.msra.mxu0 0
    %579 = vmatprep.subr.bf16.mxu0 0
    %580 = vmatpush1.bf16.msra.mxu0 0
    %581 = vmatprep.subr.bf16.mxu0 0
    %582 = vmatpush1.bf16.msra.mxu0 0
    %583 = vmatprep.mubr.bf16.mxu0 0
    %584 = vmatmul.mubr.bf16.gmra.mrb[0].mxu0 %v502
    %v585 = vpop.f32.mrb[0].mxu0
    %v586 = vadd.f32 0.0, %v585
    %v587 = vpop.f32.mrb[0].mxu0
    %v588 = vpop.f32.mrb[0].mxu0
    %v589 = vpop.f32.mrb[0].mxu0
    %590 = vdwg.mxu0
    %v591 = vrot.slane %v586, 4
    %v592 = vadd.f32 %v586, %v591
    %v593 = vrot.slane %v592, 2
    %v594 = vadd.f32 %v592, %v593
    %v595 = vrot.slane %v594, 1
    %v596 = vadd.f32 %v594, %v595
    %v597 = vmul.f32 %v586, %v586
    %v598 = vrot.slane %v597, 4
    %v599 = vadd.f32 %v597, %v598
    %v600 = vrot.slane %v599, 2
    %v601 = vadd.f32 %v599, %v600
    %v602 = vrot.slane %v601, 1
    %v603 = vadd.f32 %v601, %v602
    %v604 = vmul.f32 %v596, 0.125
    %v605 = vmul.f32 %v603, 0.125
    %v606 = vmul.f32 %v604, %v604
    %v607 = vsub.f32 %v605, %v606
    %v608 = vmax.f32 %v607, 0.0
    %v609 = vadd.f32 %v608, 1e-05
    %v610 = vrsqrt.pop %v609
    %v611 = vmul.f32 %v499, %v610
    %v612 = vmul.f32 %v604, %v611
    %v613 = vsub.f32 %v501, %v612
    %v615 = vlaneseq
    %v616 = vshrl.u32 %v615, 7
    %v617 = vsub.s32 0, %v616
    %v618 = vrot.slane %v611, %v617
    %v620 = vmul.f32 %v586, %v618
    %v622 = vlaneseq
    %v623 = vshrl.u32 %v622, 7
    %v624 = vsub.s32 0, %v623
    %v625 = vrot.slane %v613, %v624
    %v627 = vadd.f32 %v620, %v625
    %vm628 = vcmp.gt.f32.partialorder %v627, 0.0
    %v629 = vmul.f32 %v627, 0.01
    %v630 = vsel %vm628, %v627, %v629
    %s631 = scalar_lea.vmem [#allocation2], 256
    %v632 = vld [vmem:[%s631] sm:$0xf]
    %v633 = vld [vmem:[%s631 + $0x4] sm:$0xf]
    %v634 = vld [vmem:[%s631 + $0x8] sm:$0xf]
    %v635 = vld [vmem:[%s631 + $0xc] sm:$0xf]
    %v636 = vld [vmem:[%s631 + $0x10] sm:$0xf]
    %v637 = vld [vmem:[%s631 + $0x14] sm:$0xf]
    %v638 = vld [vmem:[%s631 + $0x18] sm:$0xf]
    %v639 = vld [vmem:[%s631 + $0x1c] sm:$0xf]
    %v640 = vld [vmem:[%s631 + $0x20] sm:$0xf]
    %v641 = vld [vmem:[%s631 + $0x24] sm:$0xf]
    %v642 = vld [vmem:[%s631 + $0x28] sm:$0xf]
    %v643 = vld [vmem:[%s631 + $0x2c] sm:$0xf]
    %v644 = vld [vmem:[%s631 + $0x30] sm:$0xf]
    %v645 = vld [vmem:[%s631 + $0x34] sm:$0xf]
    %v646 = vld [vmem:[%s631 + $0x38] sm:$0xf]
    %v647 = vld [vmem:[%s631 + $0x3c] sm:$0xf]
    %s648 = scalar_lea.vmem %s2, 4
    %v649 = vld [vmem:[%s648] sm:$0x1]
    %s650 = scalar_lea.vmem %s3, 4
    %v651 = vld [vmem:[%s650] sm:$0x1]
    %v652 = vpack.c.bf16 %v630, %v630
    %v669 = vunpack.c.l.b16 %v632
    %v670 = vunpack.c.l.b16 %v633
    %v671 = vunpack.c.l.b16 %v634
    %v672 = vunpack.c.l.b16 %v635
    %v673 = vunpack.c.l.b16 %v636
    %v674 = vunpack.c.l.b16 %v637
    %v675 = vunpack.c.l.b16 %v638
    %v676 = vunpack.c.l.b16 %v639
    %v677 = vunpack.c.l.b16 %v640
    %v678 = vunpack.c.l.b16 %v641
    %v679 = vunpack.c.l.b16 %v642
    %v680 = vunpack.c.l.b16 %v643
    %v681 = vunpack.c.l.b16 %v644
    %v682 = vunpack.c.l.b16 %v645
    %v683 = vunpack.c.l.b16 %v646
    %v684 = vunpack.c.l.b16 %v647
    %v685 = vpack.c.b16 %v670, %v669
    %v686 = vpack.c.b16 %v672, %v671
    %v687 = vpack.c.b16 %v674, %v673
    %v688 = vpack.c.b16 %v676, %v675
    %v689 = vpack.c.b16 %v678, %v677
    %v690 = vpack.c.b16 %v680, %v679
    %v691 = vpack.c.b16 %v682, %v681
    %v692 = vpack.c.b16 %v684, %v683
    %701 = vmatprep.subr.bf16.mxu0 0
    %702 = vmatpush1.bf16.msra.mxu0 %v685
    %703 = vmatprep.subr.bf16.mxu0 0
    %704 = vmatpush1.bf16.msra.mxu0 %v686
    %705 = vmatprep.subr.bf16.mxu0 0
    %706 = vmatpush1.bf16.msra.mxu0 %v687
    %707 = vmatprep.subr.bf16.mxu0 0
    %708 = vmatpush1.bf16.msra.mxu0 %v688
    %709 = vmatprep.subr.bf16.mxu0 0
    %710 = vmatpush1.bf16.msra.mxu0 %v689
    %711 = vmatprep.subr.bf16.mxu0 0
    %712 = vmatpush1.bf16.msra.mxu0 %v690
    %713 = vmatprep.subr.bf16.mxu0 0
    %714 = vmatpush1.bf16.msra.mxu0 %v691
    %715 = vmatprep.subr.bf16.mxu0 0
    %716 = vmatpush1.bf16.msra.mxu0 %v692
    %717 = vmatprep.subr.bf16.mxu0 0
    %718 = vmatpush1.bf16.msra.mxu0 0
    %719 = vmatprep.subr.bf16.mxu0 0
    %720 = vmatpush1.bf16.msra.mxu0 0
    %721 = vmatprep.subr.bf16.mxu0 0
    %722 = vmatpush1.bf16.msra.mxu0 0
    %723 = vmatprep.subr.bf16.mxu0 0
    %724 = vmatpush1.bf16.msra.mxu0 0
    %725 = vmatprep.subr.bf16.mxu0 0
    %726 = vmatpush1.bf16.msra.mxu0 0
    %727 = vmatprep.subr.bf16.mxu0 0
    %728 = vmatpush1.bf16.msra.mxu0 0
    %729 = vmatprep.subr.bf16.mxu0 0
    %730 = vmatpush1.bf16.msra.mxu0 0
    %731 = vmatprep.subr.bf16.mxu0 0
    %732 = vmatpush1.bf16.msra.mxu0 0
    %733 = vmatprep.mubr.bf16.mxu0 0
    %734 = vmatmul.mubr.bf16.gmra.mrb[0].mxu0 %v652
    %v735 = vpop.f32.mrb[0].mxu0
    %v736 = vadd.f32 0.0, %v735
    %v737 = vpop.f32.mrb[0].mxu0
    %v738 = vpop.f32.mrb[0].mxu0
    %v739 = vpop.f32.mrb[0].mxu0
    %740 = vdwg.mxu0
    %v741 = vrot.slane %v736, 4
    %v742 = vadd.f32 %v736, %v741
    %v743 = vrot.slane %v742, 2
    %v744 = vadd.f32 %v742, %v743
    %v745 = vrot.slane %v744, 1
    %v746 = vadd.f32 %v744, %v745
    %v747 = vmul.f32 %v736, %v736
    %v748 = vrot.slane %v747, 4
    %v749 = vadd.f32 %v747, %v748
    %v750 = vrot.slane %v749, 2
    %v751 = vadd.f32 %v749, %v750
    %v752 = vrot.slane %v751, 1
    %v753 = vadd.f32 %v751, %v752
    %v754 = vmul.f32 %v746, 0.125
    %v755 = vmul.f32 %v753, 0.125
    %v756 = vmul.f32 %v754, %v754
    %v757 = vsub.f32 %v755, %v756
    %v758 = vmax.f32 %v757, 0.0
    %v759 = vadd.f32 %v758, 1e-05
    %v760 = vrsqrt.pop %v759
    %v761 = vmul.f32 %v649, %v760
    %v762 = vmul.f32 %v754, %v761
    %v763 = vsub.f32 %v651, %v762
    %v765 = vlaneseq
    %v766 = vshrl.u32 %v765, 7
    %v767 = vsub.s32 0, %v766
    %v768 = vrot.slane %v761, %v767
    %v770 = vmul.f32 %v736, %v768
    %v772 = vlaneseq
    %v773 = vshrl.u32 %v772, 7
    %v774 = vsub.s32 0, %v773
    %v775 = vrot.slane %v763, %v774
    %v777 = vadd.f32 %v770, %v775
    %v778 = vtanh.pop %v777
    %779 = vst [vmem:[#allocation5] sm:$0xff] %v778
    // Predicated region
    $region22: #{_forward_jit.1} parent=1 // pred_check
      _
    $region23: #{_forward_jit.1} parent=1 // pred_check_branch
      %781 = sbr.rel (0) target = $region25
    $region24: #{_forward_jit.1} parent=1 // pred_region
      %s783 = ssub.s32 128, 128
      %784 = vsyncadd [#allocation4], %s783
      %s786 = sshll.u32 [#allocation5], 4
      %s787 = int_to_ptr.vmem [resolvable:$true] %s786
      %789 = dma.vmem_to_hbm [thread:$0]  %s787, 128, %s4, [#allocation4]
    $region25: #{_forward_jit.1} parent=1 // pred_fallthru
      _
    // Predicated region
    $region26: #{_forward_jit.1} parent=1 // pred_check
      _
    $region27: #{_forward_jit.1} parent=1 // pred_check_branch
      %791 = sbr.rel (0) target = $region29
    $region28: #{_forward_jit.1} parent=1 // pred_region
      %792 = dma.done [#allocation4], 128
    $region29: #{_forward_jit.1} parent=1 // pred_fallthru
      _
    %793 = vsyncpa [#allocation3], 1
    %794 = vsyncpa [#allocation4], 1

</llo_original>
